<compile_context>
chip_gen: v7x
topology: tpu7x:2x2x1
jax: 0.10.0
libtpu: 0.0.40
codegen_flags: <defaults>
</compile_context>

<pallas_src>
import functools
import math

import numpy as np

import jax
import jax.numpy as jnp
from jax.experimental import pallas as pl
from jax.experimental.pallas import tpu as pltpu


def _round_up(x, m):
    return (x + m - 1) // m * m


def xw_kernel(x_ref, w_ref, a1_ref, a2_ref, h_ref, ssrc_ref, sdst_ref):
    # h = X @ W for one row tile (f32 accumulate on the MXU).
    h = jnp.dot(x_ref[...], w_ref[...], preferred_element_type=jnp.float32)
    # bf16 copy feeds the aggregation matmul in the attention kernel.
    h_ref[...] = h.astype(jnp.bfloat16)
    # Fused attention projections (computed once, not per column step).
    ssrc_ref[...] = jnp.sum(h * a1_ref[...], axis=-1, keepdims=True)    # [T,1]
    sdst_ref[...] = jax.lax.dot_general(                                 # [1,T]
        a2_ref[...], h, (((1,), (1,)), ((), ())),
        preferred_element_type=jnp.float32)


def attn_kernel(ids_ref, cnt_ref, s_src_ref, s_dst_ref, h_col_ref, mask_ref,
                out_ref, rowsum_ref, *, alpha):
    i = pl.program_id(0)
    j = pl.program_id(1)

    @pl.when(j == 0)
    def _init():
        out_ref[...] = jnp.zeros_like(out_ref)
        rowsum_ref[...] = jnp.zeros_like(rowsum_ref)

    # Only the first cnt_ref[i] column steps carry real (non-empty) tiles;
    # padded steps repeat the previous tile id and are skipped here.
    @pl.when(j < cnt_ref[i])
    def _step():
        # logit[i, j] = a1 . h[i] + a2 . h[j] -- pure broadcast add.
        logit = s_src_ref[...] + s_dst_ref[...]            # [TM,1]+[1,TN]
        lrelu = jnp.where(logit > 0, logit, alpha * logit)
        m = mask_ref[...].astype(jnp.float32)              # int8 edge counts
        # where() guards the 0 * inf -> NaN hazard on non-edge entries.
        e = jnp.where(m > 0, m * jnp.exp(-lrelu), 0.0)     # [TM, TN] f32
        rowsum_ref[...] += jnp.sum(e, axis=-1, keepdims=True)
        # Aggregation matmul: bf16 operands, f32 accumulation into the
        # resident output block.
        out_ref[...] += jnp.dot(e.astype(jnp.bfloat16), h_col_ref[...],
                                preferred_element_type=jnp.float32)

    @pl.when(j == pl.num_programs(1) - 1)
    def _finalize():
        # EUP reciprocal instead of a vector divide (once per row tile).
        inv = pl.reciprocal(rowsum_ref[...], approx=True)  # [TM, 1]
        hp = out_ref[...] * inv                            # [TM, Fp]
        out_ref[...] = jnp.where(hp > 0, hp, jnp.exp(hp) - 1.0)   # ELU


def sp_graph_attention(x, W, a, edge_src, edge_dst, *, alpha,
                       tile_m=512, tile_n=1024):
    """Forward pass of SpGraphAttentionLayer (ELU activation, eval mode)."""
    N, Fin = x.shape
    Fout = W.shape[1]
    Fp = _round_up(Fout, 128)                 # lane-dense output width

    n128 = _round_up(N, 128)
    tile_m = min(tile_m, n128)
    tile_n = min(tile_n, n128)
    # v7x megacore: prefer >= 2 row tiles so both TensorCores get work.
    if n128 // tile_m < 2 and n128 >= 256 and (n128 // 2) % 128 == 0:
        tile_m = n128 // 2

    n_rows = _round_up(N, tile_m)             # padded query-node count
    n_cols = _round_up(N, tile_n)             # padded neighbor-node count
    n_x = max(n_rows, n_cols)                 # node padding for h / s_src / s_dst
    tile_x = math.gcd(tile_m, tile_n)         # divides both -> divides n_x

    nrt = n_rows // tile_m
    nct = n_cols // tile_n

    # ---- block-CSR metadata over (tile_m, tile_n) tiles (host-side glue) ----
    src_np = np.asarray(edge_src, dtype=np.int64)
    dst_np = np.asarray(edge_dst, dtype=np.int64)
    occ = np.zeros((nrt, nct), dtype=bool)
    occ[src_np // tile_m, dst_np // tile_n] = True
    counts = occ.sum(axis=1).astype(np.int32)
    max_nnz = max(int(counts.max()), 1)
    col_ids = np.zeros((nrt, max_nnz), dtype=np.int32)
    for i in range(nrt):
        ids = np.flatnonzero(occ[i]).astype(np.int32)
        if ids.size:
            col_ids[i, :ids.size] = ids
            col_ids[i, ids.size:] = ids[-1]   # repeat last id: DMA gets elided

    # ---- padded operands ----
    x_p = jnp.zeros((n_x, Fin), jnp.float32).at[:N].set(x)
    W_p = jnp.zeros((Fin, Fp), jnp.float32).at[:, :Fout].set(W)
    a1 = jnp.zeros((1, Fp), jnp.float32).at[0, :Fout].set(a[0, :Fout])
    a2 = jnp.zeros((1, Fp), jnp.float32).at[0, :Fout].set(a[0, Fout:])
    # int8 edge-count mask scattered directly into the padded buffer.
    # (Exact up to 127 duplicate edges per (i, j) pair.)
    mask = jnp.zeros((n_rows, n_cols), jnp.int8).at[edge_src, edge_dst].add(1)

    # ---- kernel 1: h = X @ W fused with the attention projections ----
    h_bf16, s_src, s_dst = pl.pallas_call(
        xw_kernel,
        out_shape=(jax.ShapeDtypeStruct((n_x, Fp), jnp.bfloat16),
                   jax.ShapeDtypeStruct((n_x, 1), jnp.float32),
                   jax.ShapeDtypeStruct((1, n_x), jnp.float32)),
        grid=(n_x // tile_x,),
        in_specs=[pl.BlockSpec((tile_x, Fin), lambda i: (i, 0)),
                  pl.BlockSpec((Fin, Fp), lambda i: (0, 0)),
                  pl.BlockSpec((1, Fp), lambda i: (0, 0)),
                  pl.BlockSpec((1, Fp), lambda i: (0, 0))],
        out_specs=(pl.BlockSpec((tile_x, Fp), lambda i: (i, 0)),
                   pl.BlockSpec((tile_x, 1), lambda i: (i, 0)),
                   pl.BlockSpec((1, tile_x), lambda i: (0, i))),
        compiler_params=pltpu.CompilerParams(
            dimension_semantics=("parallel",)),
    )(x_p, W_p, a1, a2)

    # ---- kernel 2: block-sparse attention + aggregation ----
    grid = (nrt, max_nnz)
    out = pl.pallas_call(
        functools.partial(attn_kernel, alpha=alpha),
        out_shape=jax.ShapeDtypeStruct((n_rows, Fp), jnp.float32),
        grid_spec=pltpu.PrefetchScalarGridSpec(
            num_scalar_prefetch=2,          # col_ids, counts -> SMEM
            grid=grid,
            in_specs=[
                # s_src rows: depends only on the row tile i.
                pl.BlockSpec((tile_m, 1), lambda i, j, ids, cnt: (i, 0)),
                # s_dst / h_col / mask: indexed by the j-th non-empty col tile.
                pl.BlockSpec((1, tile_n), lambda i, j, ids, cnt: (0, ids[i, j])),
                pl.BlockSpec((tile_n, Fp), lambda i, j, ids, cnt: (ids[i, j], 0)),
                pl.BlockSpec((tile_m, tile_n),
                             lambda i, j, ids, cnt: (i, ids[i, j])),
            ],
            out_specs=pl.BlockSpec((tile_m, Fp), lambda i, j, ids, cnt: (i, 0)),
            scratch_shapes=[pltpu.VMEM((tile_m, 1), jnp.float32)],   # rowsum
        ),
        compiler_params=pltpu.CompilerParams(
            dimension_semantics=("parallel", "arbitrary"),
            vmem_limit_bytes=32 * 1024 * 1024),
    )(jnp.asarray(col_ids), jnp.asarray(counts), s_src, s_dst, h_bf16, mask)

    return out[:N, :Fout]


def reference(x, W, a, src, dst, alpha):
    N = x.shape[0]
    Fout = W.shape[1]
    h = x @ W
    logit = (h @ a[0, :Fout])[:, None] + (h @ a[0, Fout:])[None, :]
    lrelu = jnp.where(logit > 0, logit, alpha * logit)
    adj = jnp.zeros((N, N), jnp.float32).at[src, dst].add(1.0)
    e = adj * jnp.exp(-lrelu)
    rowsum = e.sum(axis=1, keepdims=True)
    hp = (e @ h) / rowsum
    return jnp.where(hp > 0, hp, jnp.exp(hp) - 1.0)


if __name__ == "__main__":
    N, Fin, Fout = 300, 16, 32
    alpha = 0.2  # LeakyReLU negative slope

    key = jax.random.PRNGKey(0)
    kx, kw, ka = jax.random.split(key, 3)

    # Node features.
    x = jax.random.normal(kx, (N, Fin), dtype=jnp.float32)

    # Parameters (xavier_normal_, gain=1.414), deterministic.
    gain = 1.414
    w_std = gain * (2.0 / (Fin + Fout)) ** 0.5
    W = w_std * jax.random.normal(kw, (Fin, Fout), dtype=jnp.float32)
    a_std = gain * (2.0 / (1 + 2 * Fout)) ** 0.5
    a = a_std * jax.random.normal(ka, (1, 2 * Fout), dtype=jnp.float32)

    # Deterministic sparse adjacency: self-loops + forward ring edges + a few
    # long-range edges (one duplicated) so per-row-tile column-tile counts are
    # uneven and the block-sparse skip / duplicate-sum paths are exercised.
    nodes = jnp.arange(N, dtype=jnp.int32)
    extra_src = jnp.array([3, 7, 11, 3], dtype=jnp.int32)
    extra_dst = jnp.array([250, 260, 270, 250], dtype=jnp.int32)
    edge_src = jnp.concatenate([nodes, nodes, extra_src])
    edge_dst = jnp.concatenate([nodes, (nodes + 1) % N, extra_dst])

    # Small tiles (128) so several row/column tiles exist at this N.
    out = sp_graph_attention(x, W, a, edge_src, edge_dst, alpha=alpha,
                             tile_m=128, tile_n=128)
    jax.block_until_ready(out)

    ref = reference(x, W, a, edge_src, edge_dst, alpha)
    assert out.shape == (N, Fout)
    # bf16 aggregation matmul + approx reciprocal -> relaxed tolerance.
    assert jnp.allclose(out, ref, rtol=3e-2, atol=3e-2), "mismatch vs reference"

    print("KERNEL_OK")
</pallas_src>

<mosaic_0001>
module attributes {stable_mosaic.version = 11 : i64} {
  func.func @xw_kernel(%arg0: i32, %arg1: memref<128x16xf32, #tpu.memory_space<vmem>>, %arg2: memref<16x128xf32, #tpu.memory_space<vmem>>, %arg3: memref<1x128xf32, #tpu.memory_space<vmem>>, %arg4: memref<1x128xf32, #tpu.memory_space<vmem>>, %arg5: memref<128x128xbf16, #tpu.memory_space<vmem>>, %arg6: memref<128x1xf32, #tpu.memory_space<vmem>>, %arg7: memref<1x128xf32, #tpu.memory_space<vmem>>) attributes {dimension_semantics = [#tpu.dimension_semantics<parallel>], iteration_bounds = array<i64: 3>, scalar_prefetch = 0 : i64, scratch_operands = 0 : i64, tpu.core_type = #tpu.core_type<tc>, window_params = [{transform_indices = @transform_0, window_bounds = array<i64: 128, 16>}, {pipeline_mode = #tpu.pipeline_mode<synchronous>, transform_indices = @transform_1, window_bounds = array<i64: 16, 128>}, {pipeline_mode = #tpu.pipeline_mode<synchronous>, transform_indices = @transform_2, window_bounds = array<i64: 1, 128>}, {pipeline_mode = #tpu.pipeline_mode<synchronous>, transform_indices = @transform_3, window_bounds = array<i64: 1, 128>}, {transform_indices = @transform_4, window_bounds = array<i64: 128, 128>}, {transform_indices = @transform_5, window_bounds = array<i64: 128, 1>}, {transform_indices = @transform_6, window_bounds = array<i64: 1, 128>}]} {
    %c0 = arith.constant 0 : index
    %c0_0 = arith.constant 0 : index
    %0 = vector.load %arg1[%c0, %c0_0] : memref<128x16xf32, #tpu.memory_space<vmem>>, vector<128x16xf32>
    %c0_1 = arith.constant 0 : index
    %c0_2 = arith.constant 0 : index
    %1 = vector.load %arg2[%c0_1, %c0_2] : memref<16x128xf32, #tpu.memory_space<vmem>>, vector<16x128xf32>
    %cst = arith.constant dense<0.000000e+00> : vector<128x128xf32>
    %2 = tpu.matmul %0, %1, %cst {dimension_numbers = #tpu.dot_dimension_numbers<[1], [0], [0], [1], [0, 0, 1, 1], [], []>} : vector<128x16xf32>, vector<16x128xf32>, vector<128x128xf32> -> vector<128x128xf32>
    %3 = arith.truncf %2 : vector<128x128xf32> to vector<128x128xbf16>
    %c0_3 = arith.constant 0 : index
    %c0_4 = arith.constant 0 : index
    %4 = vector.load %arg5[%c0_3, %c0_4] : memref<128x128xbf16, #tpu.memory_space<vmem>>, vector<128x128xbf16>
    tpu.vector_store %arg5[%c0_3, %c0_4], %3 {strides = array<i32>} : memref<128x128xbf16, #tpu.memory_space<vmem>>, vector<128x128xbf16>,
    %c0_5 = arith.constant 0 : index
    %c0_6 = arith.constant 0 : index
    %5 = vector.load %arg3[%c0_5, %c0_6] : memref<1x128xf32, #tpu.memory_space<vmem>>, vector<1x128xf32>
    %6 = vector.broadcast %5 : vector<1x128xf32> to vector<128x128xf32>
    %7 = arith.mulf %2, %6 : vector<128x128xf32>
    %cst_7 = arith.constant dense<0.000000e+00> : vector<128xf32>
    %8 = vector.multi_reduction <add>, %7, %cst_7 [1] : vector<128x128xf32> to vector<128xf32>
    %9 = vector.shape_cast %8 : vector<128xf32> to vector<128x1xf32>
    %c0_8 = arith.constant 0 : index
    %c0_9 = arith.constant 0 : index
    %10 = vector.load %arg6[%c0_8, %c0_9] : memref<128x1xf32, #tpu.memory_space<vmem>>, vector<128x1xf32>
    tpu.vector_store %arg6[%c0_8, %c0_9], %9 {strides = array<i32>} : memref<128x1xf32, #tpu.memory_space<vmem>>, vector<128x1xf32>,
    %c0_10 = arith.constant 0 : index
    %c0_11 = arith.constant 0 : index
    %11 = vector.load %arg4[%c0_10, %c0_11] : memref<1x128xf32, #tpu.memory_space<vmem>>, vector<1x128xf32>
    %cst_12 = arith.constant dense<0.000000e+00> : vector<1x128xf32>
    %12 = tpu.matmul %11, %2, %cst_12 {dimension_numbers = #tpu.dot_dimension_numbers<[1], [1], [0], [0], [0, 0, 1, 0], [], []>} : vector<1x128xf32>, vector<128x128xf32>, vector<1x128xf32> -> vector<1x128xf32>
    %c0_13 = arith.constant 0 : index
    %c0_14 = arith.constant 0 : index
    %13 = vector.load %arg7[%c0_13, %c0_14] : memref<1x128xf32, #tpu.memory_space<vmem>>, vector<1x128xf32>
    tpu.vector_store %arg7[%c0_13, %c0_14], %12 {strides = array<i32>} : memref<1x128xf32, #tpu.memory_space<vmem>>, vector<1x128xf32>,
    return
  }
  func.func @transform_0(%arg0: i32) -> (i32, i32) {
    %c0_i32 = arith.constant 0 : i32
    %c0_i32_0 = arith.constant 0 : i32
    return %arg0, %c0_i32 : i32, i32
  }
  func.func @transform_1(%arg0: i32) -> (i32, i32) {
    %c0_i32 = arith.constant 0 : i32
    %c0_i32_0 = arith.constant 0 : i32
    %c0_i32_1 = arith.constant 0 : i32
    return %c0_i32, %c0_i32_0 : i32, i32
  }
  func.func @transform_2(%arg0: i32) -> (i32, i32) {
    %c0_i32 = arith.constant 0 : i32
    %c0_i32_0 = arith.constant 0 : i32
    %c0_i32_1 = arith.constant 0 : i32
    return %c0_i32, %c0_i32_0 : i32, i32
  }
  func.func @transform_3(%arg0: i32) -> (i32, i32) {
    %c0_i32 = arith.constant 0 : i32
    %c0_i32_0 = arith.constant 0 : i32
    %c0_i32_1 = arith.constant 0 : i32
    return %c0_i32, %c0_i32_0 : i32, i32
  }
  func.func @transform_4(%arg0: i32) -> (i32, i32) {
    %c0_i32 = arith.constant 0 : i32
    %c0_i32_0 = arith.constant 0 : i32
    return %arg0, %c0_i32 : i32, i32
  }
  func.func @transform_5(%arg0: i32) -> (i32, i32) {
    %c0_i32 = arith.constant 0 : i32
    %c0_i32_0 = arith.constant 0 : i32
    return %arg0, %c0_i32 : i32, i32
  }
  func.func @transform_6(%arg0: i32) -> (i32, i32) {
    %c0_i32 = arith.constant 0 : i32
    %c0_i32_0 = arith.constant 0 : i32
    return %c0_i32, %arg0 : i32, i32
  }
}

</mosaic_0001>

<llo_original>
// kernel: tpu_custom_call.1
$region0: #{tpu_custom_call.1}
  #allocation0 [shape = 'u32[]', space=smem, size = 0x4, offset = 0x4, fixed_abs, tag = 'smem constant byte address 0x4 - core index']
  #allocation1 [shape = 'u32[144,128]{1,0:T(1,128)}', space=vmem, size = 0x12000, scoped, tag = 'internal scratch']
  %s0 = inlined_call_operand.vmem [shape: f32[384,16], index: 0, kind: input, shape index: {}]
  %s1 = inlined_call_operand.vmem [shape: f32[16,128], index: 1, kind: input, shape index: {}]
  %s2 = inlined_call_operand.vmem [shape: f32[1,128], index: 2, kind: input, shape index: {}]
  %s3 = inlined_call_operand.vmem [shape: f32[1,128], index: 3, kind: input, shape index: {}]
  %s4 = inlined_call_operand.hbm [shape: bf16[384,128], index: 4, kind: output, shape index: {0}]
  %s5 = inlined_call_operand.vmem [shape: f32[384,1], index: 5, kind: output, shape index: {1}]
  %s6 = inlined_call_operand.hbm [shape: f32[1,384], index: 6, kind: output, shape index: {2}]
  %7 = xla_tuple %s4, %s5, %s6
  %s8 = sld [smem:[#allocation0]]
  $region65: #{tpu_custom_call.1} parent=0
    _
  %s10 = ssub.s32 1, %s8
  %s11 = scalar_select 0, %s10, %s8
  $region1: #{tpu_custom_call.1} parent=0
    #allocation2 [shape = 'u8[65536]{0}', space=vmem, size = 0x10000, scoped, tag = 'output window, operand 0']
    #allocation3 [shape = 's32[2]{0}', space=sflag, size = 0x8, scoped, tag = 'scoped memory for tpu_custom_call.1']
    #allocation4 [shape = 'u8[1024]{0}', space=vmem, size = 0x400, scoped, tag = 'output window, operand 2']
    #allocation5 [shape = 's32[2]{0}', space=sflag, size = 0x8, scoped, tag = 'scoped memory for tpu_custom_call.1']
    %12 = vsyncpa [#allocation3], 0
    %s13 = scalar_lea.sflag [#allocation3], 1
    %14 = vsyncpa %s13, 0
    %15 = vsyncpa [#allocation5], 0
    %s16 = scalar_lea.sflag [#allocation5], 1
    %17 = vsyncpa %s16, 0
    loop: start=0, step=1, limit=5
    $region2: #{tpu_custom_call.1} parent=1 // loop_pre_header
      _
    $region3: #{tpu_custom_call.1} parent=1 // loop_header
      %s19 = sphi 0, %s23
      %p20 = scmp.ge.s32.totalorder %s19, 5
      %s29 = sphi 0, %s31
      %s32 = sphi 0, %s29
      %s33 = sphi 0, %s32
      %s49 = sphi 0, %s33
      %s53 = sphi 0, %s53
      %s55 = sphi 0, %s53
      %s56 = sphi 0, %s55
      %s70 = sphi 0, %s56
      %s74 = sphi 0, %s74
      %s76 = sphi 0, %s74
      %s77 = sphi 0, %s76
      %s91 = sphi 0, %s77
      %s95 = sphi 0, %s95
      %s97 = sphi 0, %s95
      %s98 = sphi 0, %s97
      %s112 = sphi 0, %s98
      %s118 = sphi 0, %s120
      %s121 = sphi 0, %s118
      %s122 = sphi 0, %s121
      %s138 = sphi 0, %s122
      %s144 = sphi 0, %s146
      %s147 = sphi 0, %s144
      %s148 = sphi 0, %s147
      %s164 = sphi 0, %s148
      %s170 = sphi 0, %s172
      %s173 = sphi 0, %s170
      %s174 = sphi 0, %s173
      %s190 = sphi 0, %s174
    $region4: #{tpu_custom_call.1} parent=1 // loop_header_branch
      %22 = sbr.rel (%p20) target = $region8
    $region5: #{tpu_custom_call.1} parent=1 // loop_body
      %s24 = ssub.s32 %s19, 1
      %s25 = ssub.s32 %s19, 2
      %s26 = sadd.s32 %s19, 1
      %s27 = ssub.s32 %s19, %s26
      %p28 = scmp.eq.s32.totalorder %s27, 0
      %s30 = sadd.s32 %s29, 1
      %s31 = scalar_select %p28, %s29, %s30
      %p34 = pneg %p28
      %p35 = scmp.eq.s32.totalorder %s19, 2
      %p36 = por %p34, %p35
      %p37 = scmp.ne.s32.totalorder %s29, %s32
      %p38 = scmp.eq.s32.totalorder %s19, 0
      %p39 = por %p37, %p38
      %p40 = scmp.ne.s32.totalorder %s29, %s32
      %p41 = scmp.eq.s32.totalorder %s24, 2
      %p42 = por %p40, %p41
      %p43 = scmp.ne.s32.totalorder %s32, %s33
      %p44 = scmp.eq.s32.totalorder %s24, 0
      %p45 = por %p43, %p44
      %p46 = scmp.ne.s32.totalorder %s32, %s33
      %p47 = scmp.eq.s32.totalorder %s25, 2
      %p48 = por %p46, %p47
      %p50 = scmp.ne.s32.totalorder %s33, %s49
      %p51 = scmp.eq.s32.totalorder %s25, 0
      %p52 = por %p50, %p51
      %s54 = sadd.s32 %s53, 1
      %p57 = scmp.eq.s32.totalorder %s19, 2
      %p58 = scmp.ne.s32.totalorder %s53, %s55
      %p59 = scmp.eq.s32.totalorder %s19, 0
      %p60 = por %p58, %p59
      %p61 = scmp.ne.s32.totalorder %s53, %s55
      %p62 = scmp.eq.s32.totalorder %s24, 2
      %p63 = por %p61, %p62
      %p64 = scmp.ne.s32.totalorder %s55, %s56
      %p65 = scmp.eq.s32.totalorder %s24, 0
      %p66 = por %p64, %p65
      %p67 = scmp.ne.s32.totalorder %s55, %s56
      %p68 = scmp.eq.s32.totalorder %s25, 2
      %p69 = por %p67, %p68
      %p71 = scmp.ne.s32.totalorder %s56, %s70
      %p72 = scmp.eq.s32.totalorder %s25, 0
      %p73 = por %p71, %p72
      %s75 = sadd.s32 %s74, 1
      %p78 = scmp.eq.s32.totalorder %s19, 2
      %p79 = scmp.ne.s32.totalorder %s74, %s76
      %p80 = scmp.eq.s32.totalorder %s19, 0
      %p81 = por %p79, %p80
      %p82 = scmp.ne.s32.totalorder %s74, %s76
      %p83 = scmp.eq.s32.totalorder %s24, 2
      %p84 = por %p82, %p83
      %p85 = scmp.ne.s32.totalorder %s76, %s77
      %p86 = scmp.eq.s32.totalorder %s24, 0
      %p87 = por %p85, %p86
      %p88 = scmp.ne.s32.totalorder %s76, %s77
      %p89 = scmp.eq.s32.totalorder %s25, 2
      %p90 = por %p88, %p89
      %p92 = scmp.ne.s32.totalorder %s77, %s91
      %p93 = scmp.eq.s32.totalorder %s25, 0
      %p94 = por %p92, %p93
      %s96 = sadd.s32 %s95, 1
      %p99 = scmp.eq.s32.totalorder %s19, 2
      %p100 = scmp.ne.s32.totalorder %s95, %s97
      %p101 = scmp.eq.s32.totalorder %s19, 0
      %p102 = por %p100, %p101
      %p103 = scmp.ne.s32.totalorder %s95, %s97
      %p104 = scmp.eq.s32.totalorder %s24, 2
      %p105 = por %p103, %p104
      %p106 = scmp.ne.s32.totalorder %s97, %s98
      %p107 = scmp.eq.s32.totalorder %s24, 0
      %p108 = por %p106, %p107
      %p109 = scmp.ne.s32.totalorder %s97, %s98
      %p110 = scmp.eq.s32.totalorder %s25, 2
      %p111 = por %p109, %p110
      %p113 = scmp.ne.s32.totalorder %s98, %s112
      %p114 = scmp.eq.s32.totalorder %s25, 0
      %p115 = por %p113, %p114
      %s116 = ssub.s32 %s19, %s26
      %p117 = scmp.eq.s32.totalorder %s116, 0
      %s119 = sadd.s32 %s118, 1
      %s120 = scalar_select %p117, %s118, %s119
      %p123 = pneg %p117
      %p124 = scmp.eq.s32.totalorder %s19, 2
      %p125 = por %p123, %p124
      %p126 = scmp.ne.s32.totalorder %s118, %s121
      %p127 = scmp.eq.s32.totalorder %s19, 0
      %p128 = por %p126, %p127
      %p129 = scmp.ne.s32.totalorder %s118, %s121
      %p130 = scmp.eq.s32.totalorder %s24, 2
      %p131 = por %p129, %p130
      %p132 = scmp.ne.s32.totalorder %s121, %s122
      %p133 = scmp.eq.s32.totalorder %s24, 0
      %p134 = por %p132, %p133
      %p135 = scmp.ne.s32.totalorder %s121, %s122
      %p136 = scmp.eq.s32.totalorder %s25, 2
      %p137 = por %p135, %p136
      %p139 = scmp.ne.s32.totalorder %s122, %s138
      %p140 = scmp.eq.s32.totalorder %s25, 0
      %p141 = por %p139, %p140
      %s142 = ssub.s32 %s19, %s26
      %p143 = scmp.eq.s32.totalorder %s142, 0
      %s145 = sadd.s32 %s144, 1
      %s146 = scalar_select %p143, %s144, %s145
      %p149 = pneg %p143
      %p150 = scmp.eq.s32.totalorder %s19, 2
      %p151 = por %p149, %p150
      %p152 = scmp.ne.s32.totalorder %s144, %s147
      %p153 = scmp.eq.s32.totalorder %s19, 0
      %p154 = por %p152, %p153
      %p155 = scmp.ne.s32.totalorder %s144, %s147
      %p156 = scmp.eq.s32.totalorder %s24, 2
      %p157 = por %p155, %p156
      %p158 = scmp.ne.s32.totalorder %s147, %s148
      %p159 = scmp.eq.s32.totalorder %s24, 0
      %p160 = por %p158, %p159
      %p161 = scmp.ne.s32.totalorder %s147, %s148
      %p162 = scmp.eq.s32.totalorder %s25, 2
      %p163 = por %p161, %p162
      %p165 = scmp.ne.s32.totalorder %s148, %s164
      %p166 = scmp.eq.s32.totalorder %s25, 0
      %p167 = por %p165, %p166
      %s168 = ssub.s32 %s19, %s26
      %p169 = scmp.eq.s32.totalorder %s168, 0
      %s171 = sadd.s32 %s170, 1
      %s172 = scalar_select %p169, %s170, %s171
      %p175 = pneg %p169
      %p176 = scmp.eq.s32.totalorder %s19, 2
      %p177 = por %p175, %p176
      %p178 = scmp.ne.s32.totalorder %s170, %s173
      %p179 = scmp.eq.s32.totalorder %s19, 0
      %p180 = por %p178, %p179
      %p181 = scmp.ne.s32.totalorder %s170, %s173
      %p182 = scmp.eq.s32.totalorder %s24, 2
      %p183 = por %p181, %p182
      %p184 = scmp.ne.s32.totalorder %s173, %s174
      %p185 = scmp.eq.s32.totalorder %s24, 0
      %p186 = por %p184, %p185
      %p187 = scmp.ne.s32.totalorder %s173, %s174
      %p188 = scmp.eq.s32.totalorder %s25, 2
      %p189 = por %p187, %p188
      %p191 = scmp.ne.s32.totalorder %s174, %s190
      %p192 = scmp.eq.s32.totalorder %s25, 0
      %p193 = por %p191, %p192
      %p194 = scmp.le.s32.totalorder 1, %s19
      %p195 = scmp.lt.s32.totalorder %s19, 4
      %p196 = pnand %p194, %p195
      %p197 = pneg %p196
      // Predicated region
      $region9: #{tpu_custom_call.1} parent=5 // pred_check
        _
      $region10: #{tpu_custom_call.1} parent=5 // pred_check_branch
        %199 = sbr.rel (%p196) target = $region12
      $region11: #{tpu_custom_call.1} parent=5 // pred_region
        %s200 = ssub.s32 %s19, 1
        // Predicated region
        $region13: #{tpu_custom_call.1} parent=11 // pred_check
          %p201 = pneg %p66
        $region14: #{tpu_custom_call.1} parent=11 // pred_check_branch
          %203 = sbr.rel (%p201) target = $region16
        $region15: #{tpu_custom_call.1} parent=11 // pred_region
          _
        $region16: #{tpu_custom_call.1} parent=11 // pred_fallthru
          _
        // Predicated region
        $region17: #{tpu_custom_call.1} parent=11 // pred_check
          %p204 = pneg %p87
        $region18: #{tpu_custom_call.1} parent=11 // pred_check_branch
          %206 = sbr.rel (%p204) target = $region20
        $region19: #{tpu_custom_call.1} parent=11 // pred_region
          _
        $region20: #{tpu_custom_call.1} parent=11 // pred_fallthru
          _
        // Predicated region
        $region21: #{tpu_custom_call.1} parent=11 // pred_check
          %p207 = pneg %p108
        $region22: #{tpu_custom_call.1} parent=11 // pred_check_branch
          %209 = sbr.rel (%p207) target = $region24
        $region23: #{tpu_custom_call.1} parent=11 // pred_region
          _
        $region24: #{tpu_custom_call.1} parent=11 // pred_fallthru
          _
      $region12: #{tpu_custom_call.1} parent=5 // pred_fallthru
        _
      %p210 = scmp.lt.s32.totalorder %s19, 3
      // Predicated region
      $region25: #{tpu_custom_call.1} parent=5 // pred_check
        %p211 = pneg %p210
      $region26: #{tpu_custom_call.1} parent=5 // pred_check_branch
        %213 = sbr.rel (%p211) target = $region28
      $region27: #{tpu_custom_call.1} parent=5 // pred_region
        // Predicated region
        $region29: #{tpu_custom_call.1} parent=27 // pred_check
          %p214 = pneg %p39
        $region30: #{tpu_custom_call.1} parent=27 // pred_check_branch
          %216 = sbr.rel (%p214) target = $region32
        $region31: #{tpu_custom_call.1} parent=27 // pred_region
          %s217 = smul.u32 16, %s19
          %p218 = scmp.lt.s32.totalorder %s217, 47
          %s219 = scalar_select %p218, %s217, 47
          %s220 = smul.addr %s219, 8
          %s221 = scalar_lea.vmem %s0, %s220
          %s222 = smul.u32 16, %s19
        $region32: #{tpu_custom_call.1} parent=27 // pred_fallthru
          _
      $region28: #{tpu_custom_call.1} parent=5 // pred_fallthru
        _
      %p223 = scmp.le.s32.totalorder 1, %s19
      %p224 = scmp.lt.s32.totalorder %s19, 4
      %p225 = pnand %p223, %p224
      %p226 = pneg %p225
      // Predicated region
      $region33: #{tpu_custom_call.1} parent=5 // pred_check
        _
      $region34: #{tpu_custom_call.1} parent=5 // pred_check_branch
        %228 = sbr.rel (%p225) target = $region36
      $region35: #{tpu_custom_call.1} parent=5 // pred_region
        %s229 = ssub.s32 %s19, 1
        %s230 = smul.u32 16, %s24
        %p231 = scmp.lt.s32.totalorder %s230, 47
        %s232 = scalar_select %p231, %s230, 47
        %s233 = smul.addr %s232, 8
        %s234 = scalar_lea.vmem %s0, %s233
        %p235 = pneg %p45
        %p236 = pneg %p42
        %p237 = pneg %p66
        %p238 = pneg %p63
        %p239 = pneg %p87
        %p240 = pneg %p84
        %p241 = pneg %p108
        %p242 = pneg %p105
        %p243 = pneg %p134
        %p244 = pneg %p131
        %s245 = sand.u32 %s121, 1
        %s246 = scalar_lea.sflag [#allocation3], %s245
        %s247 = sand.u32 %s121, 1
        %s248 = smul.addr %s247, 64
        %s249 = scalar_lea.vmem [#allocation2], %s248
        %p250 = pneg %p160
        %p251 = pneg %p157
        %s252 = smul.u32 16, %s24
        %p253 = scmp.lt.s32.totalorder %s252, 47
        %s254 = scalar_select %p253, %s252, 47
        %s255 = smul.addr %s254, 8
        %s256 = scalar_lea.vmem %s5, %s255
        %p257 = pneg %p186
        %p258 = pneg %p183
        %s259 = sand.u32 %s173, 1
        %s260 = scalar_lea.sflag [#allocation5], %s259
        %s261 = sand.u32 %s173, 1
        %s262 = scalar_lea.vmem [#allocation4], %s261
        %s263 = smul.u32 16, %s24
        %p264 = scmp.lt.s32.totalorder %s263, 47
        %s265 = scalar_select %p264, %s263, 47
        %s266 = smul.addr %s265, 8
        %s267 = scalar_lea.vmem %s0, %s266
        %s268 = smul.u32 16, %s24
        %s269 = smul.u32 16, %s24
        %s270 = smul.u32 16, %s24
        %p271 = scmp.lt.s32.totalorder %s270, 47
        %s272 = scalar_select %p271, %s270, 47
        %s273 = smul.addr %s272, 8
        %s274 = scalar_lea.vmem %s5, %s273
        %s275 = smul.u32 16, %s24
        %v276 = vld [vmem:[%s267] sm:$0xff]
        %v277 = vld [vmem:[%s267 + $0x8] sm:$0xff]
        %v278 = vld [vmem:[%s267 + $0x10] sm:$0xff]
        %v279 = vld [vmem:[%s267 + $0x18] sm:$0xff]
        %v280 = vld [vmem:[%s267 + $0x20] sm:$0xff]
        %v281 = vld [vmem:[%s267 + $0x28] sm:$0xff]
        %v282 = vld [vmem:[%s267 + $0x30] sm:$0xff]
        %v283 = vld [vmem:[%s267 + $0x38] sm:$0xff]
        %v284 = vld [vmem:[%s267 + $0x40] sm:$0xff]
        %v285 = vld [vmem:[%s267 + $0x48] sm:$0xff]
        %v286 = vld [vmem:[%s267 + $0x50] sm:$0xff]
        %v287 = vld [vmem:[%s267 + $0x58] sm:$0xff]
        %v288 = vld [vmem:[%s267 + $0x60] sm:$0xff]
        %v289 = vld [vmem:[%s267 + $0x68] sm:$0xff]
        %v290 = vld [vmem:[%s267 + $0x70] sm:$0xff]
        %v291 = vld [vmem:[%s267 + $0x78] sm:$0xff]
        %v292 = vld [vmem:[%s1] sm:$0xff]
        %v293 = vld [vmem:[%s1 + $0x8] sm:$0xff]
        %vm294 = vcmask 130048
        %v296 = vsel %vm294, %v276, 0
        %v299 = vsel %vm294, %v277, 0
        %v302 = vsel %vm294, %v278, 0
        %v305 = vsel %vm294, %v279, 0
        %v308 = vsel %vm294, %v280, 0
        %v311 = vsel %vm294, %v281, 0
        %v314 = vsel %vm294, %v282, 0
        %v317 = vsel %vm294, %v283, 0
        %v320 = vsel %vm294, %v284, 0
        %v323 = vsel %vm294, %v285, 0
        %v326 = vsel %vm294, %v286, 0
        %v329 = vsel %vm294, %v287, 0
        %v332 = vsel %vm294, %v288, 0
        %v335 = vsel %vm294, %v289, 0
        %v338 = vsel %vm294, %v290, 0
        %v341 = vsel %vm294, %v291, 0
        %343 = vmatprep.subr.mxu0 0.0
        %344 = vmatpush1.msra.mxu0 %v292
        %345 = vmatprep.subr.mxu0 0.0
        %346 = vmatpush1.msra.mxu0 %v293
        %347 = vmatprep.subr.mxu0 0.0
        %348 = vmatpush1.msra.mxu0 0.0
        %349 = vmatprep.subr.mxu0 0.0
        %350 = vmatpush1.msra.mxu0 0.0
        %351 = vmatprep.subr.mxu0 0.0
        %352 = vmatpush1.msra.mxu0 0.0
        %353 = vmatprep.subr.mxu0 0.0
        %354 = vmatpush1.msra.mxu0 0.0
        %355 = vmatprep.subr.mxu0 0.0
        %356 = vmatpush1.msra.mxu0 0.0
        %357 = vmatprep.subr.mxu0 0.0
        %358 = vmatpush1.msra.mxu0 0.0
        %359 = vmatprep.subr.mxu0 0.0
        %360 = vmatpush1.msra.mxu0 0.0
        %361 = vmatprep.subr.mxu0 0.0
        %362 = vmatpush1.msra.mxu0 0.0
        %363 = vmatprep.subr.mxu0 0.0
        %364 = vmatpush1.msra.mxu0 0.0
        %365 = vmatprep.subr.mxu0 0.0
        %366 = vmatpush1.msra.mxu0 0.0
        %367 = vmatprep.subr.mxu0 0.0
        %368 = vmatpush1.msra.mxu0 0.0
        %369 = vmatprep.subr.mxu0 0.0
        %370 = vmatpush1.msra.mxu0 0.0
        %371 = vmatprep.subr.mxu0 0.0
        %372 = vmatpush1.msra.mxu0 0.0
        %373 = vmatprep.subr.mxu0 0.0
        %374 = vmatpush1.msra.mxu0 0.0
        %375 = vmatprep.subr.mxu0 0.0
        %376 = vmatpush1.msra.mxu0 0.0
        %377 = vmatprep.subr.mxu0 0.0
        %378 = vmatpush1.msra.mxu0 0.0
        %379 = vmatprep.subr.mxu0 0.0
        %380 = vmatpush1.msra.mxu0 0.0
        %381 = vmatprep.subr.mxu0 0.0
        %382 = vmatpush1.msra.mxu0 0.0
        %383 = vmatprep.subr.mxu0 0.0
        %384 = vmatpush1.msra.mxu0 0.0
        %385 = vmatprep.subr.mxu0 0.0
        %386 = vmatpush1.msra.mxu0 0.0
        %387 = vmatprep.subr.mxu0 0.0
        %388 = vmatpush1.msra.mxu0 0.0
        %389 = vmatprep.subr.mxu0 0.0
        %390 = vmatpush1.msra.mxu0 0.0
        %391 = vmatprep.subr.mxu0 0.0
        %392 = vmatpush1.msra.mxu0 0.0
        %393 = vmatprep.subr.mxu0 0.0
        %394 = vmatpush1.msra.mxu0 0.0
        %395 = vmatprep.subr.mxu0 0.0
        %396 = vmatpush1.msra.mxu0 0.0
        %397 = vmatprep.subr.mxu0 0.0
        %398 = vmatpush1.msra.mxu0 0.0
        %399 = vmatprep.subr.mxu0 0.0
        %400 = vmatpush1.msra.mxu0 0.0
        %401 = vmatprep.subr.mxu0 0.0
        %402 = vmatpush1.msra.mxu0 0.0
        %403 = vmatprep.subr.mxu0 0.0
        %404 = vmatpush1.msra.mxu0 0.0
        %405 = vmatprep.subr.mxu0 0.0
        %406 = vmatpush1.msra.mxu0 0.0
        %407 = vmatprep.mubr.f32.mxu0 0.0
        %408 = vmatmul.mubr.f32.gmra.mrb[0].mxu0 %v296
        %v409 = vpop.f32.mrb[0].mxu0
        %v410 = vadd.f32 0.0, %v409
        %v411 = vpop.f32.mrb[0].mxu0
        %412 = vmatprep.mubr.f32.mxu0 0.0
        %413 = vmatmul.mubr.f32.gmra.mrb[0].mxu0 %v299
        %v414 = vpop.f32.mrb[0].mxu0
        %v415 = vadd.f32 0.0, %v414
        %v416 = vpop.f32.mrb[0].mxu0
        %417 = vmatprep.mubr.f32.mxu0 0.0
        %418 = vmatmul.mubr.f32.gmra.mrb[0].mxu0 %v302
        %v419 = vpop.f32.mrb[0].mxu0
        %v420 = vadd.f32 0.0, %v419
        %v421 = vpop.f32.mrb[0].mxu0
        %422 = vmatprep.mubr.f32.mxu0 0.0
        %423 = vmatmul.mubr.f32.gmra.mrb[0].mxu0 %v305
        %v424 = vpop.f32.mrb[0].mxu0
        %v425 = vadd.f32 0.0, %v424
        %v426 = vpop.f32.mrb[0].mxu0
        %427 = vmatprep.mubr.f32.mxu0 0.0
        %428 = vmatmul.mubr.f32.gmra.mrb[0].mxu0 %v308
        %v429 = vpop.f32.mrb[0].mxu0
        %v430 = vadd.f32 0.0, %v429
        %v431 = vpop.f32.mrb[0].mxu0
        %432 = vmatprep.mubr.f32.mxu0 0.0
        %433 = vmatmul.mubr.f32.gmra.mrb[0].mxu0 %v311
        %v434 = vpop.f32.mrb[0].mxu0
        %v435 = vadd.f32 0.0, %v434
        %v436 = vpop.f32.mrb[0].mxu0
        %437 = vmatprep.mubr.f32.mxu0 0.0
        %438 = vmatmul.mubr.f32.gmra.mrb[0].mxu0 %v314
        %v439 = vpop.f32.mrb[0].mxu0
        %v440 = vadd.f32 0.0, %v439
        %v441 = vpop.f32.mrb[0].mxu0
        %442 = vmatprep.mubr.f32.mxu0 0.0
        %443 = vmatmul.mubr.f32.gmra.mrb[0].mxu0 %v317
        %v444 = vpop.f32.mrb[0].mxu0
        %v445 = vadd.f32 0.0, %v444
        %v446 = vpop.f32.mrb[0].mxu0
        %447 = vmatprep.mubr.f32.mxu0 0.0
        %448 = vmatmul.mubr.f32.gmra.mrb[0].mxu0 %v320
        %v449 = vpop.f32.mrb[0].mxu0
        %v450 = vadd.f32 0.0, %v449
        %v451 = vpop.f32.mrb[0].mxu0
        %452 = vmatprep.mubr.f32.mxu0 0.0
        %453 = vmatmul.mubr.f32.gmra.mrb[0].mxu0 %v323
        %v454 = vpop.f32.mrb[0].mxu0
        %v455 = vadd.f32 0.0, %v454
        %v456 = vpop.f32.mrb[0].mxu0
        %457 = vmatprep.mubr.f32.mxu0 0.0
        %458 = vmatmul.mubr.f32.gmra.mrb[0].mxu0 %v326
        %v459 = vpop.f32.mrb[0].mxu0
        %v460 = vadd.f32 0.0, %v459
        %v461 = vpop.f32.mrb[0].mxu0
        %462 = vmatprep.mubr.f32.mxu0 0.0
        %463 = vmatmul.mubr.f32.gmra.mrb[0].mxu0 %v329
        %v464 = vpop.f32.mrb[0].mxu0
        %v465 = vadd.f32 0.0, %v464
        %v466 = vpop.f32.mrb[0].mxu0
        %467 = vmatprep.mubr.f32.mxu0 0.0
        %468 = vmatmul.mubr.f32.gmra.mrb[0].mxu0 %v332
        %v469 = vpop.f32.mrb[0].mxu0
        %v470 = vadd.f32 0.0, %v469
        %v471 = vpop.f32.mrb[0].mxu0
        %472 = vmatprep.mubr.f32.mxu0 0.0
        %473 = vmatmul.mubr.f32.gmra.mrb[0].mxu0 %v335
        %v474 = vpop.f32.mrb[0].mxu0
        %v475 = vadd.f32 0.0, %v474
        %v476 = vpop.f32.mrb[0].mxu0
        %477 = vmatprep.mubr.f32.mxu0 0.0
        %478 = vmatmul.mubr.f32.gmra.mrb[0].mxu0 %v338
        %v479 = vpop.f32.mrb[0].mxu0
        %v480 = vadd.f32 0.0, %v479
        %v481 = vpop.f32.mrb[0].mxu0
        %482 = vmatprep.mubr.f32.mxu0 0.0
        %483 = vmatmul.mubr.f32.gmra.mrb[0].mxu0 %v341
        %v484 = vpop.f32.mrb[0].mxu0
        %v485 = vadd.f32 0.0, %v484
        %v486 = vpop.f32.mrb[0].mxu0
        %487 = vdwg.mxu0
        %v488 = vpack.c.bf16 %v415, %v410
        %v489 = vpack.c.bf16 %v425, %v420
        %v490 = vpack.c.bf16 %v435, %v430
        %v491 = vpack.c.bf16 %v445, %v440
        %v492 = vpack.c.bf16 %v455, %v450
        %v493 = vpack.c.bf16 %v465, %v460
        %v494 = vpack.c.bf16 %v475, %v470
        %v495 = vpack.c.bf16 %v485, %v480
        %v504 = vunpack.c.l.b16 %v488
        %v505 = vunpack.c.h.b16 %v488
        %v506 = vunpack.c.l.b16 %v489
        %v507 = vunpack.c.h.b16 %v489
        %v508 = vunpack.c.l.b16 %v490
        %v509 = vunpack.c.h.b16 %v490
        %v510 = vunpack.c.l.b16 %v491
        %v511 = vunpack.c.h.b16 %v491
        %v512 = vunpack.c.l.b16 %v492
        %v513 = vunpack.c.h.b16 %v492
        %v514 = vunpack.c.l.b16 %v493
        %v515 = vunpack.c.h.b16 %v493
        %v516 = vunpack.c.l.b16 %v494
        %v517 = vunpack.c.h.b16 %v494
        %v518 = vunpack.c.l.b16 %v495
        %v519 = vunpack.c.h.b16 %v495
        %v520 = vpack.c.b16 %v504, %v504
        %v521 = vpack.c.b16 %v505, %v505
        %v522 = vpack.c.b16 %v506, %v506
        %v523 = vpack.c.b16 %v507, %v507
        %v524 = vpack.c.b16 %v508, %v508
        %v525 = vpack.c.b16 %v509, %v509
        %v526 = vpack.c.b16 %v510, %v510
        %v527 = vpack.c.b16 %v511, %v511
        %v528 = vpack.c.b16 %v512, %v512
        %v529 = vpack.c.b16 %v513, %v513
        %v530 = vpack.c.b16 %v514, %v514
        %v531 = vpack.c.b16 %v515, %v515
        %v532 = vpack.c.b16 %v516, %v516
        %v533 = vpack.c.b16 %v517, %v517
        %v534 = vpack.c.b16 %v518, %v518
        %v535 = vpack.c.b16 %v519, %v519
        %552 = vst [vmem:[%s249] sm:$0xf] %v520
        %553 = vst [vmem:[%s249 + $0x4] sm:$0xf] %v521
        %554 = vst [vmem:[%s249 + $0x8] sm:$0xf] %v522
        %555 = vst [vmem:[%s249 + $0xc] sm:$0xf] %v523
        %556 = vst [vmem:[%s249 + $0x10] sm:$0xf] %v524
        %557 = vst [vmem:[%s249 + $0x14] sm:$0xf] %v525
        %558 = vst [vmem:[%s249 + $0x18] sm:$0xf] %v526
        %559 = vst [vmem:[%s249 + $0x1c] sm:$0xf] %v527
        %560 = vst [vmem:[%s249 + $0x20] sm:$0xf] %v528
        %561 = vst [vmem:[%s249 + $0x24] sm:$0xf] %v529
        %562 = vst [vmem:[%s249 + $0x28] sm:$0xf] %v530
        %563 = vst [vmem:[%s249 + $0x2c] sm:$0xf] %v531
        %564 = vst [vmem:[%s249 + $0x30] sm:$0xf] %v532
        %565 = vst [vmem:[%s249 + $0x34] sm:$0xf] %v533
        %566 = vst [vmem:[%s249 + $0x38] sm:$0xf] %v534
        %567 = vst [vmem:[%s249 + $0x3c] sm:$0xf] %v535
        %v568 = vld [vmem:[%s2] sm:$0x1]
        %v570 = vlaneseq
        %v571 = vshrl.u32 %v570, 7
        %v572 = vsub.s32 0, %v571
        %v573 = vrot.slane %v568, %v572
        %v575 = vmul.f32 %v410, %v573
        %v576 = vmul.f32 %v415, %v573
        %v577 = vmul.f32 %v420, %v573
        %v578 = vmul.f32 %v425, %v573
        %v579 = vmul.f32 %v430, %v573
        %v580 = vmul.f32 %v435, %v573
        %v581 = vmul.f32 %v440, %v573
        %v582 = vmul.f32 %v445, %v573
        %v583 = vmul.f32 %v450, %v573
        %v584 = vmul.f32 %v455, %v573
        %v585 = vmul.f32 %v460, %v573
        %v586 = vmul.f32 %v465, %v573
        %v587 = vmul.f32 %v470, %v573
        %v588 = vmul.f32 %v475, %v573
        %v589 = vmul.f32 %v480, %v573
        %v590 = vmul.f32 %v485, %v573
        %591 = vadd.xlane.f32.xlu0 %v575
        %v592 = vpop.xlane.xlu0 %591
        %593 = vadd.xlane.f32.xlu0 %v576
        %v594 = vpop.xlane.xlu0 %593
        %595 = vadd.xlane.f32.xlu0 %v577
        %v596 = vpop.xlane.xlu0 %595
        %597 = vadd.xlane.f32.xlu0 %v578
        %v598 = vpop.xlane.xlu0 %597
        %599 = vadd.xlane.f32.xlu0 %v579
        %v600 = vpop.xlane.xlu0 %599
        %601 = vadd.xlane.f32.xlu0 %v580
        %v602 = vpop.xlane.xlu0 %601
        %603 = vadd.xlane.f32.xlu0 %v581
        %v604 = vpop.xlane.xlu0 %603
        %605 = vadd.xlane.f32.xlu0 %v582
        %v606 = vpop.xlane.xlu0 %605
        %607 = vadd.xlane.f32.xlu0 %v583
        %v608 = vpop.xlane.xlu0 %607
        %609 = vadd.xlane.f32.xlu0 %v584
        %v610 = vpop.xlane.xlu0 %609
        %611 = vadd.xlane.f32.xlu0 %v585
        %v612 = vpop.xlane.xlu0 %611
        %613 = vadd.xlane.f32.xlu0 %v586
        %v614 = vpop.xlane.xlu0 %613
        %615 = vadd.xlane.f32.xlu0 %v587
        %v616 = vpop.xlane.xlu0 %615
        %617 = vadd.xlane.f32.xlu0 %v588
        %v618 = vpop.xlane.xlu0 %617
        %619 = vadd.xlane.f32.xlu0 %v589
        %v620 = vpop.xlane.xlu0 %619
        %621 = vadd.xlane.f32.xlu0 %v590
        %v622 = vpop.xlane.xlu0 %621
        %vm623 = vcmask 7168
        %624 = vst.msk [vmem:[%s274] sm:$0xff] %vm623, %v592
        %625 = vst.msk [vmem:[%s274 + $0x8] sm:$0xff] %vm623, %v594
        %626 = vst.msk [vmem:[%s274 + $0x10] sm:$0xff] %vm623, %v596
        %627 = vst.msk [vmem:[%s274 + $0x18] sm:$0xff] %vm623, %v598
        %628 = vst.msk [vmem:[%s274 + $0x20] sm:$0xff] %vm623, %v600
        %629 = vst.msk [vmem:[%s274 + $0x28] sm:$0xff] %vm623, %v602
        %630 = vst.msk [vmem:[%s274 + $0x30] sm:$0xff] %vm623, %v604
        %631 = vst.msk [vmem:[%s274 + $0x38] sm:$0xff] %vm623, %v606
        %632 = vst.msk [vmem:[%s274 + $0x40] sm:$0xff] %vm623, %v608
        %633 = vst.msk [vmem:[%s274 + $0x48] sm:$0xff] %vm623, %v610
        %634 = vst.msk [vmem:[%s274 + $0x50] sm:$0xff] %vm623, %v612
        %635 = vst.msk [vmem:[%s274 + $0x58] sm:$0xff] %vm623, %v614
        %636 = vst.msk [vmem:[%s274 + $0x60] sm:$0xff] %vm623, %v616
        %637 = vst.msk [vmem:[%s274 + $0x68] sm:$0xff] %vm623, %v618
        %638 = vst.msk [vmem:[%s274 + $0x70] sm:$0xff] %vm623, %v620
        %639 = vst.msk [vmem:[%s274 + $0x78] sm:$0xff] %vm623, %v622
        %v640 = vld [vmem:[%s3] sm:$0x1]
        %641 = vmatprep.subr.mxu0 0.0
        %642 = vmatpush1.xpose.msra.mxu0 %v410
        %643 = vmatprep.subr.mxu0 0.0
        %644 = vmatpush1.xpose.msra.mxu0 %v415
        %645 = vmatprep.subr.mxu0 0.0
        %646 = vmatpush1.xpose.msra.mxu0 %v420
        %647 = vmatprep.subr.mxu0 0.0
        %648 = vmatpush1.xpose.msra.mxu0 %v425
        %649 = vmatprep.subr.mxu0 0.0
        %650 = vmatpush1.xpose.msra.mxu0 %v430
        %651 = vmatprep.subr.mxu0 0.0
        %652 = vmatpush1.xpose.msra.mxu0 %v435
        %653 = vmatprep.subr.mxu0 0.0
        %654 = vmatpush1.xpose.msra.mxu0 %v440
        %655 = vmatprep.subr.mxu0 0.0
        %656 = vmatpush1.xpose.msra.mxu0 %v445
        %657 = vmatprep.subr.mxu0 0.0
        %658 = vmatpush1.xpose.msra.mxu0 %v450
        %659 = vmatprep.subr.mxu0 0.0
        %660 = vmatpush1.xpose.msra.mxu0 %v455
        %661 = vmatprep.subr.mxu0 0.0
        %662 = vmatpush1.xpose.msra.mxu0 %v460
        %663 = vmatprep.subr.mxu0 0.0
        %664 = vmatpush1.xpose.msra.mxu0 %v465
        %665 = vmatprep.subr.mxu0 0.0
        %666 = vmatpush1.xpose.msra.mxu0 %v470
        %667 = vmatprep.subr.mxu0 0.0
        %668 = vmatpush1.xpose.msra.mxu0 %v475
        %669 = vmatprep.subr.mxu0 0.0
        %670 = vmatpush1.xpose.msra.mxu0 %v480
        %671 = vmatprep.subr.mxu0 0.0
        %672 = vmatpush1.xpose.msra.mxu0 %v485
        %673 = vmatprep.subr.mxu0 0.0
        %674 = vmatpush1.xpose.msra.mxu0 0.0
        %675 = vmatprep.subr.mxu0 0.0
        %676 = vmatpush1.xpose.msra.mxu0 0.0
        %677 = vmatprep.subr.mxu0 0.0
        %678 = vmatpush1.xpose.msra.mxu0 0.0
        %679 = vmatprep.subr.mxu0 0.0
        %680 = vmatpush1.xpose.msra.mxu0 0.0
        %681 = vmatprep.subr.mxu0 0.0
        %682 = vmatpush1.xpose.msra.mxu0 0.0
        %683 = vmatprep.subr.mxu0 0.0
        %684 = vmatpush1.xpose.msra.mxu0 0.0
        %685 = vmatprep.subr.mxu0 0.0
        %686 = vmatpush1.xpose.msra.mxu0 0.0
        %687 = vmatprep.subr.mxu0 0.0
        %688 = vmatpush1.xpose.msra.mxu0 0.0
        %689 = vmatprep.subr.mxu0 0.0
        %690 = vmatpush1.xpose.msra.mxu0 0.0
        %691 = vmatprep.subr.mxu0 0.0
        %692 = vmatpush1.xpose.msra.mxu0 0.0
        %693 = vmatprep.subr.mxu0 0.0
        %694 = vmatpush1.xpose.msra.mxu0 0.0
        %695 = vmatprep.subr.mxu0 0.0
        %696 = vmatpush1.xpose.msra.mxu0 0.0
        %697 = vmatprep.subr.mxu0 0.0
        %698 = vmatpush1.xpose.msra.mxu0 0.0
        %699 = vmatprep.subr.mxu0 0.0
        %700 = vmatpush1.xpose.msra.mxu0 0.0
        %701 = vmatprep.subr.mxu0 0.0
        %702 = vmatpush1.xpose.msra.mxu0 0.0
        %703 = vmatprep.subr.mxu0 0.0
        %704 = vmatpush1.xpose.msra.mxu0 0.0
        %705 = vmatprep.mubr.f32.mxu0 0.0
        %706 = vmatmul.mubr.f32.gmra.mrb[0].mxu0 %v640
        %v707 = vpop.f32.mrb[0].mxu0
        %v708 = vadd.f32 0.0, %v707
        %v709 = vpop.f32.mrb[0].mxu0
        %710 = vdwg.mxu0
        %711 = vst [vmem:[%s262] sm:$0x1] %v708
        %s712 = sand.u32 %s121, 1
        %s713 = scalar_lea.sflag [#allocation3], %s712
        %s714 = sand.u32 %s121, 1
        %s715 = smul.addr %s714, 64
        %s716 = scalar_lea.vmem [#allocation2], %s715
        %s717 = smul.u32 16, %s24
        %p718 = scmp.lt.s32.totalorder %s717, 47
        %s719 = scalar_select %p718, %s717, 47
        %s720 = smul.addr %s719, 8
        %s721 = scalar_lea.vmem %s5, %s720
        %s722 = sand.u32 %s173, 1
        %s723 = scalar_lea.sflag [#allocation5], %s722
        %s724 = sand.u32 %s173, 1
        %s725 = scalar_lea.vmem [#allocation4], %s724
        // Predicated region
        $region37: #{tpu_custom_call.1} parent=35 // pred_check
          %p726 = pneg %p131
        $region38: #{tpu_custom_call.1} parent=35 // pred_check_branch
          %728 = sbr.rel (%p726) target = $region40
        $region39: #{tpu_custom_call.1} parent=35 // pred_region
          %s729 = smul.u32 16, %s24
          %s731 = ssub.s32 1024, 1024
          %732 = vsyncadd %s713, %s731
          %s733 = smul.addr %s729, 64
          %s734 = scalar_lea.hbm %s4, %s733
          %s735 = sshll.u32 %s716, 4
          %s736 = int_to_ptr.vmem [resolvable:$true] %s735
          %741 = dma.vmem_to_hbm [thread:$0]  %s736, 1024, %s734, %s713, 64, 64, 4
        $region40: #{tpu_custom_call.1} parent=35 // pred_fallthru
          _
        // Predicated region
        $region41: #{tpu_custom_call.1} parent=35 // pred_check
          %p742 = pneg %p157
        $region42: #{tpu_custom_call.1} parent=35 // pred_check_branch
          %744 = sbr.rel (%p742) target = $region44
        $region43: #{tpu_custom_call.1} parent=35 // pred_region
          %s745 = smul.u32 16, %s24
        $region44: #{tpu_custom_call.1} parent=35 // pred_fallthru
          _
        // Predicated region
        $region45: #{tpu_custom_call.1} parent=35 // pred_check
          %p746 = pneg %p183
        $region46: #{tpu_custom_call.1} parent=35 // pred_check_branch
          %748 = sbr.rel (%p746) target = $region48
        $region47: #{tpu_custom_call.1} parent=35 // pred_region
          %s750 = ssub.s32 16, 16
          %751 = vsyncadd %s723, %s750
          %s752 = smul.addr %s24, 16
          %s753 = scalar_lea.hbm %s6, %s752
          %s755 = sshll.u32 %s725, 4
          %s756 = int_to_ptr.vmem [resolvable:$true] %s755
          %758 = dma.vmem_to_hbm [thread:$0]  %s756, 16, %s753, %s723
        $region48: #{tpu_custom_call.1} parent=35 // pred_fallthru
          _
      $region36: #{tpu_custom_call.1} parent=5 // pred_fallthru
        _
      %p759 = scmp.le.s32.totalorder 2, %s19
      // Predicated region
      $region49: #{tpu_custom_call.1} parent=5 // pred_check
        %p760 = pneg %p759
      $region50: #{tpu_custom_call.1} parent=5 // pred_check_branch
        %762 = sbr.rel (%p760) target = $region52
      $region51: #{tpu_custom_call.1} parent=5 // pred_region
        %s763 = ssub.s32 %s19, 2
        // Predicated region
        $region53: #{tpu_custom_call.1} parent=51 // pred_check
          %p764 = pneg %p137
        $region54: #{tpu_custom_call.1} parent=51 // pred_check_branch
          %766 = sbr.rel (%p764) target = $region56
        $region55: #{tpu_custom_call.1} parent=51 // pred_region
          %s767 = sand.u32 %s122, 1
          %s768 = scalar_lea.sflag [#allocation3], %s767
          %s769 = sand.u32 %s122, 1
          %s770 = smul.addr %s769, 64
          %s771 = scalar_lea.vmem [#allocation2], %s770
          %772 = dma.done %s768, 1024
        $region56: #{tpu_custom_call.1} parent=51 // pred_fallthru
          _
        // Predicated region
        $region57: #{tpu_custom_call.1} parent=51 // pred_check
          %p773 = pneg %p163
        $region58: #{tpu_custom_call.1} parent=51 // pred_check_branch
          %775 = sbr.rel (%p773) target = $region60
        $region59: #{tpu_custom_call.1} parent=51 // pred_region
          %s776 = smul.u32 16, %s25
          %p777 = scmp.lt.s32.totalorder %s776, 47
          %s778 = scalar_select %p777, %s776, 47
          %s779 = smul.addr %s778, 8
          %s780 = scalar_lea.vmem %s5, %s779
        $region60: #{tpu_custom_call.1} parent=51 // pred_fallthru
          _
        // Predicated region
        $region61: #{tpu_custom_call.1} parent=51 // pred_check
          %p781 = pneg %p189
        $region62: #{tpu_custom_call.1} parent=51 // pred_check_branch
          %783 = sbr.rel (%p781) target = $region64
        $region63: #{tpu_custom_call.1} parent=51 // pred_region
          %s784 = sand.u32 %s174, 1
          %s785 = scalar_lea.sflag [#allocation5], %s784
          %s786 = sand.u32 %s174, 1
          %s787 = scalar_lea.vmem [#allocation4], %s786
          %788 = dma.done %s785, 16
        $region64: #{tpu_custom_call.1} parent=51 // pred_fallthru
          _
      $region52: #{tpu_custom_call.1} parent=5 // pred_fallthru
        _
    $region6: #{tpu_custom_call.1} parent=1 // loop_footer
      %s23 = sadd.s32 1, %s19
    $region7: #{tpu_custom_call.1} parent=1 // loop_footer_branch
      %18 = sbr.rel target = $region3
    $region8: #{tpu_custom_call.1} parent=1 // loop_exit
      _
    %789 = vsyncpa [#allocation3], 1
    %s790 = scalar_lea.sflag [#allocation3], 1
    %791 = vsyncpa %s790, 1
    %792 = vsyncpa [#allocation5], 1
    %s793 = scalar_lea.sflag [#allocation5], 1
    %794 = vsyncpa %s793, 1

</llo_original>
